<compile_context>
chip_gen: v7x
topology: tpu7x:2x2x1
jax: 0.10.0
libtpu: 0.0.40
codegen_flags: <defaults>
</compile_context>

<pallas_src>
import functools

import jax
import jax.numpy as jnp
import numpy as np
from jax import lax
from jax.experimental import pallas as pl
from jax.experimental.pallas import tpu as pltpu


def _dense_clip_kernel(*refs, apply_mask: bool):
    """One grid step = one block of TB batch rows.

    Refs (in order), apply_mask selects whether label/filter are present:
      cls_ref      (TB, D)    f32  : feature gathered at argmax(captions)
      feat_ref     (TB, L, D) f32  : token features
      tmask_ref    (TB, L, 1) f32  : additive text mask (0 / -10000)
      ncls_ref     (TB, D)    f32  : noise for the cls feature
      nfeat_ref    (TB, L, D) f32  : noise for the token features
      head_w_ref   (D, C)     bf16 : head.weight^T
      local_w_ref  (D, C)     bf16 : local_head.weight^T
      [label_ref   (TB, C)    f32  : multi-hot labels      (only if apply_mask)]
      [filt_ref    (C, D)     f32  : filter_local          (only if apply_mask)]
      out_c_ref    (TB, 2C)   f32  : [logits_head | logits_local]
      out_d_ref    (TB, 2D)   f32  : [cls feature | mean token feature]
    """
    if apply_mask:
        (cls_ref, feat_ref, tmask_ref, ncls_ref, nfeat_ref,
         head_w_ref, local_w_ref, label_ref, filt_ref,
         out_c_ref, out_d_ref) = refs
    else:
        (cls_ref, feat_ref, tmask_ref, ncls_ref, nfeat_ref,
         head_w_ref, local_w_ref, out_c_ref, out_d_ref) = refs

    TB, L, D = feat_ref.shape
    C = head_w_ref.shape[1]

    feats = feat_ref[...]                                   # (TB, L, D)
    cls = cls_ref[...]                                      # (TB, D)

    # L2 normalization (f32)
    cls_n = cls * lax.rsqrt(jnp.sum(cls * cls, axis=-1, keepdims=True))
    feats_n = feats * lax.rsqrt(jnp.sum(feats * feats, axis=-1, keepdims=True))

    # + 0.03 * randn (noise supplied by the wrapper for determinism)
    cls_n = cls_n + 0.03 * ncls_ref[...]
    feats_n = feats_n + 0.03 * nfeat_ref[...]

    if apply_mask:                                          # epoch > 20 branch (static)
        binary = (label_ref[...] != 0.0).astype(jnp.float32)            # (TB, C)
        count = jnp.sum(binary, axis=-1, keepdims=True)                 # (TB, 1)
        mask_local = jnp.dot(binary, filt_ref[...],
                             preferred_element_type=jnp.float32) / count  # (TB, D)
        feats_n = feats_n * mask_local[:, None, :]
        cls_n = cls_n * mask_local

    # head logits: (TB, D) @ (D, C), bf16 inputs, f32 accumulation
    logits_head = jnp.dot((3.0 * cls_n).astype(jnp.bfloat16), head_w_ref[...],
                          preferred_element_type=jnp.float32)           # (TB, C)

    # local logits: (TB*L, D) @ (D, C) -> (TB, L, C)
    local_logit = jnp.dot(feats_n.reshape(TB * L, D).astype(jnp.bfloat16),
                          local_w_ref[...],
                          preferred_element_type=jnp.float32).reshape(TB, L, C)

    # masked softmax over the sequence axis, then attention-weighted sum
    scores = local_logit * 50.0 + tmask_ref[...]            # (TB, L, C)
    scores = scores - jnp.max(scores, axis=1, keepdims=True)
    e = jnp.exp(scores)
    attn = e * pl.reciprocal(jnp.sum(e, axis=1, keepdims=True), approx=True)
    logits_local = jnp.sum(attn * local_logit, axis=1)      # (TB, C)

    featmean = jnp.sum(feats_n, axis=1) * (1.0 / L)         # (TB, D)

    # lane-dense concatenated output slabs
    out_c_ref[:, 0:C] = logits_head
    out_c_ref[:, C:2 * C] = logits_local
    out_d_ref[:, 0:D] = cls_n
    out_d_ref[:, D:2 * D] = featmean


def dense_clip_forward(feat, captions, label, noise_cls, noise_feat,
                       head_w_t, local_w_t, filter_local, epoch=0, block_b=8):
    """feat (B,L,D) f32, captions (B,L) i32, label (B,C), head_w_t/local_w_t (D,C),
    filter_local (C,D).  Returns (logits_head, logits_local, cls_feature, feat_mean)."""
    B, L, D = feat.shape
    C = head_w_t.shape[1]
    apply_mask = bool(epoch > 20)

    # ---- cheap XLA-side prep, hoisted out of the kernel ----
    idx = jnp.argmax(captions, axis=-1)
    cls = jnp.take_along_axis(feat, idx[:, None, None], axis=1)[:, 0, :]      # (B, D)
    tmask = ((captions == 0).astype(jnp.float32) * -10000.0)[:, :, None]      # (B, L, 1)

    head_w_bf = head_w_t.astype(jnp.bfloat16)
    local_w_bf = local_w_t.astype(jnp.bfloat16)

    feat = feat.astype(jnp.float32)
    noise_cls = noise_cls.astype(jnp.float32)
    noise_feat = noise_feat.astype(jnp.float32)
    label_f = label.astype(jnp.float32)
    filter_local = filter_local.astype(jnp.float32)

    # ---- pad the batch to a multiple of the per-step batch block TB ----
    TB = int(block_b)
    pad = (-B) % TB
    if pad:
        feat = jnp.concatenate([feat, jnp.ones((pad, L, D), jnp.float32)], axis=0)
        cls = jnp.concatenate([cls, jnp.ones((pad, D), jnp.float32)], axis=0)
        tmask = jnp.concatenate([tmask, jnp.zeros((pad, L, 1), jnp.float32)], axis=0)
        noise_cls = jnp.concatenate([noise_cls, jnp.zeros((pad, D), jnp.float32)], axis=0)
        noise_feat = jnp.concatenate([noise_feat, jnp.zeros((pad, L, D), jnp.float32)], axis=0)
        if apply_mask:
            pad_lbl = jnp.zeros((pad, C), jnp.float32).at[:, 0].set(1.0)   # count > 0
            label_f = jnp.concatenate([label_f, pad_lbl], axis=0)
    Bp = B + pad
    nb = Bp // TB

    in_specs = [
        pl.BlockSpec((TB, D), lambda b: (b, 0)),         # cls
        pl.BlockSpec((TB, L, D), lambda b: (b, 0, 0)),   # feat
        pl.BlockSpec((TB, L, 1), lambda b: (b, 0, 0)),   # additive text mask
        pl.BlockSpec((TB, D), lambda b: (b, 0)),         # noise_cls
        pl.BlockSpec((TB, L, D), lambda b: (b, 0, 0)),   # noise_feat
        pl.BlockSpec((D, C), lambda b: (0, 0)),          # head.weight^T (bf16)
        pl.BlockSpec((D, C), lambda b: (0, 0)),          # local_head.weight^T (bf16)
    ]
    args = [cls, feat, tmask, noise_cls, noise_feat, head_w_bf, local_w_bf]
    if apply_mask:
        in_specs += [pl.BlockSpec((TB, C), lambda b: (b, 0)),   # label
                     pl.BlockSpec((C, D), lambda b: (0, 0))]    # filter_local
        args += [label_f, filter_local]

    out_specs = (pl.BlockSpec((TB, 2 * C), lambda b: (b, 0)),
                 pl.BlockSpec((TB, 2 * D), lambda b: (b, 0)))
    out_shape = (jax.ShapeDtypeStruct((Bp, 2 * C), jnp.float32),
                 jax.ShapeDtypeStruct((Bp, 2 * D), jnp.float32))

    # VMEM budget estimate (double-buffered batch blocks + weights + outputs);
    # capped below the v7x physical 64 MiB ceiling.
    block_bytes = (2 * TB * L * D * 4 + 2 * TB * D * 4 + TB * L * 4
                   + 2 * D * C * 2
                   + (TB * C * 4 + C * D * 4 if apply_mask else 0)
                   + TB * 2 * C * 4 + TB * 2 * D * 4)
    vmem_limit = int(min(max(4 * block_bytes, 16 * 1024 * 1024), 64 * 1024 * 1024))

    kernel = functools.partial(_dense_clip_kernel, apply_mask=apply_mask)
    out_c, out_d = pl.pallas_call(
        kernel,
        out_shape=out_shape,
        grid=(nb,),
        in_specs=in_specs,
        out_specs=out_specs,
        compiler_params=pltpu.CompilerParams(
            dimension_semantics=("parallel",),
            vmem_limit_bytes=vmem_limit),
    )(*args)

    return (out_c[:B, :C], out_c[:B, C:], out_d[:B, :D], out_d[:B, D:])


def _reference(feat, captions, label, noise_cls, noise_feat,
               head_w_t, local_w_t, filter_local, epoch):
    """Pure-JAX mirror of the PyTorch forward (training branch).  The two Linear
    matmuls are evaluated with bf16 inputs / f32 accumulation to mirror the kernel."""
    B, L, D = feat.shape
    idx = jnp.argmax(captions, axis=-1)
    cls = feat[jnp.arange(B), idx]
    cls = cls * lax.rsqrt(jnp.sum(cls * cls, axis=-1, keepdims=True))        # x/||x||
    feats = feat * lax.rsqrt(jnp.sum(feat * feat, axis=-1, keepdims=True))
    cls = cls + 0.03 * noise_cls
    feats = feats + 0.03 * noise_feat
    if epoch > 20:
        binary = (label != 0).astype(jnp.float32)
        count = binary.sum(-1, keepdims=True)
        mask_local = (binary @ filter_local) / count
        feats = feats * mask_local[:, None, :]
        cls = cls * mask_local
    hw = head_w_t.astype(jnp.bfloat16)
    lw = local_w_t.astype(jnp.bfloat16)
    logits_head = jnp.dot((3.0 * cls).astype(jnp.bfloat16), hw,
                          preferred_element_type=jnp.float32)
    local_logit = jnp.einsum('bld,dc->blc', feats.astype(jnp.bfloat16), lw,
                             preferred_element_type=jnp.float32)
    text_mask = (captions == 0).astype(jnp.float32) * -10000.0
    attn = jax.nn.softmax(local_logit * 50.0 + text_mask[:, :, None], axis=1)
    logits_local = jnp.sum(attn * local_logit, axis=1)
    return logits_head, logits_local, cls, feats.sum(axis=1) / L


if __name__ == "__main__":
    B, L, D, C = 2, 8, 32, 4          # batch, seq tokens, embed dim, num classnames

    key = jax.random.PRNGKey(0)
    k_feat, k_hw, k_lw, k_fl, k_n1, k_n2 = jax.random.split(key, 6)

    feat = jax.random.normal(k_feat, (B, L, D), dtype=jnp.float32)
    # token ids with trailing zero padding (argmax / pad mask both well defined)
    captions = jnp.array([[5, 90, 12, 7, 0, 0, 0, 0],
                          [3, 8, 120, 40, 9, 0, 0, 0]], dtype=jnp.int32)
    # multi-hot labels, >= 1 positive per row (count > 0)
    label = jnp.array([[1., 0., 1., 0.],
                       [0., 1., 0., 1.]], dtype=jnp.float32)

    # deterministic parameter init (module __init__: Linear(D, C, bias=False) x2, filter)
    head_w_t = 0.1 * jax.random.normal(k_hw, (D, C), dtype=jnp.float32)
    local_w_t = 0.1 * jax.random.normal(k_lw, (D, C), dtype=jnp.float32)
    filter_local = 1.0 + 0.05 * jax.random.normal(k_fl, (C, D), dtype=jnp.float32)

    # deterministic "noise" standing in for torch.randn
    noise_cls = jax.random.normal(k_n1, (B, D), dtype=jnp.float32)
    noise_feat = jax.random.normal(k_n2, (B, L, D), dtype=jnp.float32)

    for epoch in (25, 0):             # exercises both the epoch>20 mask branch and the plain branch
        outs = dense_clip_forward(feat, captions, label, noise_cls, noise_feat,
                                  head_w_t, local_w_t, filter_local, epoch=epoch)
        outs = jax.block_until_ready(outs)
        refs = _reference(feat, captions, label, noise_cls, noise_feat,
                          head_w_t, local_w_t, filter_local, epoch)
        # logits go through bf16 MXU inputs (+ approx reciprocal) -> ~1e-3 level noise;
        # cls feature and feat-mean stay in pure f32 -> tight tolerance.
        tols = ((1e-2, 1e-2), (1e-2, 1e-2), (1e-5, 1e-5), (1e-5, 1e-5))
        for o, r, (rt, at) in zip(outs, refs, tols):
            np.testing.assert_allclose(np.asarray(o), np.asarray(r), rtol=rt, atol=at)

    print("KERNEL_OK")
</pallas_src>

<mosaic_0001>
module attributes {stable_mosaic.version = 11 : i64} {
  func.func @_dense_clip_kernel(%arg0: i32, %arg1: memref<8x32xf32, #tpu.memory_space<vmem>>, %arg2: memref<8x8x32xf32, #tpu.memory_space<vmem>>, %arg3: memref<8x8x1xf32, #tpu.memory_space<vmem>>, %arg4: memref<8x32xf32, #tpu.memory_space<vmem>>, %arg5: memref<8x8x32xf32, #tpu.memory_space<vmem>>, %arg6: memref<32x4xbf16, #tpu.memory_space<vmem>>, %arg7: memref<32x4xbf16, #tpu.memory_space<vmem>>, %arg8: memref<8x4xf32, #tpu.memory_space<vmem>>, %arg9: memref<4x32xf32, #tpu.memory_space<vmem>>, %arg10: memref<8x8xf32, #tpu.memory_space<vmem>>, %arg11: memref<8x64xf32, #tpu.memory_space<vmem>>) attributes {dimension_semantics = [#tpu.dimension_semantics<parallel>], iteration_bounds = array<i64: 1>, scalar_prefetch = 0 : i64, scratch_operands = 0 : i64, tpu.core_type = #tpu.core_type<tc>, window_params = [{transform_indices = @transform_0, window_bounds = array<i64: 8, 32>}, {transform_indices = @transform_1, window_bounds = array<i64: 8, 8, 32>}, {transform_indices = @transform_2, window_bounds = array<i64: 8, 8, 1>}, {transform_indices = @transform_3, window_bounds = array<i64: 8, 32>}, {transform_indices = @transform_4, window_bounds = array<i64: 8, 8, 32>}, {pipeline_mode = #tpu.pipeline_mode<synchronous>, transform_indices = @transform_5, window_bounds = array<i64: 32, 4>}, {pipeline_mode = #tpu.pipeline_mode<synchronous>, transform_indices = @transform_6, window_bounds = array<i64: 32, 4>}, {transform_indices = @transform_7, window_bounds = array<i64: 8, 4>}, {pipeline_mode = #tpu.pipeline_mode<synchronous>, transform_indices = @transform_8, window_bounds = array<i64: 4, 32>}, {transform_indices = @transform_9, window_bounds = array<i64: 8, 8>}, {transform_indices = @transform_10, window_bounds = array<i64: 8, 64>}]} {
    %c0 = arith.constant 0 : index
    %c0_0 = arith.constant 0 : index
    %c0_1 = arith.constant 0 : index
    %0 = vector.load %arg2[%c0, %c0_0, %c0_1] : memref<8x8x32xf32, #tpu.memory_space<vmem>>, vector<8x8x32xf32>
    %c0_2 = arith.constant 0 : index
    %c0_3 = arith.constant 0 : index
    %1 = vector.load %arg1[%c0_2, %c0_3] : memref<8x32xf32, #tpu.memory_space<vmem>>, vector<8x32xf32>
    %2 = arith.mulf %1, %1 : vector<8x32xf32>
    %cst = arith.constant dense<0.000000e+00> : vector<8xf32>
    %3 = vector.multi_reduction <add>, %2, %cst [1] : vector<8x32xf32> to vector<8xf32>
    %4 = vector.shape_cast %3 : vector<8xf32> to vector<8x1xf32>
    %5 = math.rsqrt %4 : vector<8x1xf32>
    %6 = vector.broadcast %5 : vector<8x1xf32> to vector<8x32xf32>
    %7 = arith.mulf %1, %6 : vector<8x32xf32>
    %8 = arith.mulf %0, %0 : vector<8x8x32xf32>
    %cst_4 = arith.constant dense<0.000000e+00> : vector<8x8xf32>
    %9 = vector.multi_reduction <add>, %8, %cst_4 [2] : vector<8x8x32xf32> to vector<8x8xf32>
    %10 = vector.shape_cast %9 : vector<8x8xf32> to vector<8x8x1xf32>
    %11 = math.rsqrt %10 : vector<8x8x1xf32>
    %12 = vector.broadcast %11 : vector<8x8x1xf32> to vector<8x8x32xf32>
    %13 = arith.mulf %0, %12 : vector<8x8x32xf32>
    %c0_5 = arith.constant 0 : index
    %c0_6 = arith.constant 0 : index
    %14 = vector.load %arg4[%c0_5, %c0_6] : memref<8x32xf32, #tpu.memory_space<vmem>>, vector<8x32xf32>
    %cst_7 = arith.constant 3.000000e-02 : f32
    %15 = vector.broadcast %cst_7 : f32 to vector<8x32xf32>
    %16 = arith.mulf %15, %14 : vector<8x32xf32>
    %17 = arith.addf %7, %16 : vector<8x32xf32>
    %c0_8 = arith.constant 0 : index
    %c0_9 = arith.constant 0 : index
    %c0_10 = arith.constant 0 : index
    %18 = vector.load %arg5[%c0_8, %c0_9, %c0_10] : memref<8x8x32xf32, #tpu.memory_space<vmem>>, vector<8x8x32xf32>
    %cst_11 = arith.constant 3.000000e-02 : f32
    %19 = vector.broadcast %cst_11 : f32 to vector<8x8x32xf32>
    %20 = arith.mulf %19, %18 : vector<8x8x32xf32>
    %21 = arith.addf %13, %20 : vector<8x8x32xf32>
    %c0_12 = arith.constant 0 : index
    %c0_13 = arith.constant 0 : index
    %22 = vector.load %arg8[%c0_12, %c0_13] : memref<8x4xf32, #tpu.memory_space<vmem>>, vector<8x4xf32>
    %cst_14 = arith.constant 0.000000e+00 : f32
    %23 = vector.broadcast %cst_14 : f32 to vector<8x4xf32>
    %24 = arith.cmpf one, %22, %23 : vector<8x4xf32>
    %25 = arith.extui %24 : vector<8x4xi1> to vector<8x4xi32>
    %26 = arith.sitofp %25 : vector<8x4xi32> to vector<8x4xf32>
    %cst_15 = arith.constant dense<0.000000e+00> : vector<8xf32>
    %27 = vector.multi_reduction <add>, %26, %cst_15 [1] : vector<8x4xf32> to vector<8xf32>
    %28 = vector.shape_cast %27 : vector<8xf32> to vector<8x1xf32>
    %c0_16 = arith.constant 0 : index
    %c0_17 = arith.constant 0 : index
    %29 = vector.load %arg9[%c0_16, %c0_17] : memref<4x32xf32, #tpu.memory_space<vmem>>, vector<4x32xf32>
    %cst_18 = arith.constant dense<0.000000e+00> : vector<8x32xf32>
    %30 = tpu.matmul %26, %29, %cst_18 {dimension_numbers = #tpu.dot_dimension_numbers<[1], [0], [0], [1], [0, 0, 1, 1], [], []>} : vector<8x4xf32>, vector<4x32xf32>, vector<8x32xf32> -> vector<8x32xf32>
    %31 = vector.broadcast %28 : vector<8x1xf32> to vector<8x32xf32>
    %32 = arith.divf %30, %31 : vector<8x32xf32>
    %33 = vector.shape_cast %32 : vector<8x32xf32> to vector<8x1x32xf32>
    %34 = vector.broadcast %33 : vector<8x1x32xf32> to vector<8x8x32xf32>
    %35 = arith.mulf %21, %34 : vector<8x8x32xf32>
    %36 = arith.mulf %17, %32 : vector<8x32xf32>
    %cst_19 = arith.constant 3.000000e+00 : f32
    %37 = vector.broadcast %cst_19 : f32 to vector<8x32xf32>
    %38 = arith.mulf %37, %36 : vector<8x32xf32>
    %39 = arith.truncf %38 : vector<8x32xf32> to vector<8x32xbf16>
    %c0_20 = arith.constant 0 : index
    %c0_21 = arith.constant 0 : index
    %40 = vector.load %arg6[%c0_20, %c0_21] : memref<32x4xbf16, #tpu.memory_space<vmem>>, vector<32x4xbf16>
    %cst_22 = arith.constant dense<0.000000e+00> : vector<8x4xf32>
    %41 = tpu.matmul %39, %40, %cst_22 {dimension_numbers = #tpu.dot_dimension_numbers<[1], [0], [0], [1], [0, 0, 1, 1], [], []>} : vector<8x32xbf16>, vector<32x4xbf16>, vector<8x4xf32> -> vector<8x4xf32>
    %42 = vector.shape_cast %35 : vector<8x8x32xf32> to vector<64x32xf32>
    %43 = arith.truncf %42 : vector<64x32xf32> to vector<64x32xbf16>
    %c0_23 = arith.constant 0 : index
    %c0_24 = arith.constant 0 : index
    %44 = vector.load %arg7[%c0_23, %c0_24] : memref<32x4xbf16, #tpu.memory_space<vmem>>, vector<32x4xbf16>
    %cst_25 = arith.constant dense<0.000000e+00> : vector<64x4xf32>
    %45 = tpu.matmul %43, %44, %cst_25 {dimension_numbers = #tpu.dot_dimension_numbers<[1], [0], [0], [1], [0, 0, 1, 1], [], []>} : vector<64x32xbf16>, vector<32x4xbf16>, vector<64x4xf32> -> vector<64x4xf32>
    %46 = vector.shape_cast %45 : vector<64x4xf32> to vector<8x8x4xf32>
    %cst_26 = arith.constant 5.000000e+01 : f32
    %47 = vector.broadcast %cst_26 : f32 to vector<8x8x4xf32>
    %48 = arith.mulf %46, %47 : vector<8x8x4xf32>
    %c0_27 = arith.constant 0 : index
    %c0_28 = arith.constant 0 : index
    %c0_29 = arith.constant 0 : index
    %49 = vector.load %arg3[%c0_27, %c0_28, %c0_29] : memref<8x8x1xf32, #tpu.memory_space<vmem>>, vector<8x8x1xf32>
    %50 = vector.broadcast %49 : vector<8x8x1xf32> to vector<8x8x4xf32>
    %51 = arith.addf %48, %50 : vector<8x8x4xf32>
    %cst_30 = arith.constant dense<0xFF800000> : vector<8x4xf32>
    %52 = vector.multi_reduction <maximumf>, %51, %cst_30 [1] : vector<8x8x4xf32> to vector<8x4xf32>
    %53 = vector.shape_cast %52 : vector<8x4xf32> to vector<8x1x4xf32>
    %54 = vector.broadcast %53 : vector<8x1x4xf32> to vector<8x8x4xf32>
    %55 = arith.subf %51, %54 : vector<8x8x4xf32>
    %56 = math.exp %55 : vector<8x8x4xf32>
    %cst_31 = arith.constant dense<0.000000e+00> : vector<8x4xf32>
    %57 = vector.multi_reduction <add>, %56, %cst_31 [1] : vector<8x8x4xf32> to vector<8x4xf32>
    %58 = vector.shape_cast %57 : vector<8x4xf32> to vector<8x1x4xf32>
    %59 = tpu.reciprocal %58 {approx = true} : vector<8x1x4xf32> -> vector<8x1x4xf32>
    %60 = vector.broadcast %59 : vector<8x1x4xf32> to vector<8x8x4xf32>
    %61 = arith.mulf %56, %60 : vector<8x8x4xf32>
    %62 = arith.mulf %61, %46 : vector<8x8x4xf32>
    %cst_32 = arith.constant dense<0.000000e+00> : vector<8x4xf32>
    %63 = vector.multi_reduction <add>, %62, %cst_32 [1] : vector<8x8x4xf32> to vector<8x4xf32>
    %cst_33 = arith.constant dense<0.000000e+00> : vector<8x32xf32>
    %64 = vector.multi_reduction <add>, %35, %cst_33 [1] : vector<8x8x32xf32> to vector<8x32xf32>
    %cst_34 = arith.constant 1.250000e-01 : f32
    %65 = vector.broadcast %cst_34 : f32 to vector<8x32xf32>
    %66 = arith.mulf %64, %65 : vector<8x32xf32>
    %c0_35 = arith.constant 0 : index
    %c0_36 = arith.constant 0 : index
    %67 = vector.load %arg10[%c0_35, %c0_36] : memref<8x8xf32, #tpu.memory_space<vmem>>, vector<8x4xf32>
    tpu.vector_store %arg10[%c0_35, %c0_36], %41 {strides = array<i32>} : memref<8x8xf32, #tpu.memory_space<vmem>>, vector<8x4xf32>,
    %c0_37 = arith.constant 0 : index
    %c4 = arith.constant 4 : index
    %68 = vector.load %arg10[%c0_37, %c4] : memref<8x8xf32, #tpu.memory_space<vmem>>, vector<8x4xf32>
    tpu.vector_store %arg10[%c0_37, %c4], %63 {strides = array<i32>} : memref<8x8xf32, #tpu.memory_space<vmem>>, vector<8x4xf32>,
    %c0_38 = arith.constant 0 : index
    %c0_39 = arith.constant 0 : index
    %69 = vector.load %arg11[%c0_38, %c0_39] : memref<8x64xf32, #tpu.memory_space<vmem>>, vector<8x32xf32>
    tpu.vector_store %arg11[%c0_38, %c0_39], %36 {strides = array<i32>} : memref<8x64xf32, #tpu.memory_space<vmem>>, vector<8x32xf32>,
    %c0_40 = arith.constant 0 : index
    %c32 = arith.constant 32 : index
    %70 = vector.load %arg11[%c0_40, %c32] : memref<8x64xf32, #tpu.memory_space<vmem>>, vector<8x32xf32>
    tpu.vector_store %arg11[%c0_40, %c32], %66 {strides = array<i32>} : memref<8x64xf32, #tpu.memory_space<vmem>>, vector<8x32xf32>,
    return
  }
  func.func @transform_0(%arg0: i32) -> (i32, i32) {
    %c0_i32 = arith.constant 0 : i32
    %c0_i32_0 = arith.constant 0 : i32
    return %arg0, %c0_i32 : i32, i32
  }
  func.func @transform_1(%arg0: i32) -> (i32, i32, i32) {
    %c0_i32 = arith.constant 0 : i32
    %c0_i32_0 = arith.constant 0 : i32
    %c0_i32_1 = arith.constant 0 : i32
    return %arg0, %c0_i32, %c0_i32_0 : i32, i32, i32
  }
  func.func @transform_2(%arg0: i32) -> (i32, i32, i32) {
    %c0_i32 = arith.constant 0 : i32
    %c0_i32_0 = arith.constant 0 : i32
    %c0_i32_1 = arith.constant 0 : i32
    return %arg0, %c0_i32, %c0_i32_0 : i32, i32, i32
  }
  func.func @transform_3(%arg0: i32) -> (i32, i32) {
    %c0_i32 = arith.constant 0 : i32
    %c0_i32_0 = arith.constant 0 : i32
    return %arg0, %c0_i32 : i32, i32
  }
  func.func @transform_4(%arg0: i32) -> (i32, i32, i32) {
    %c0_i32 = arith.constant 0 : i32
    %c0_i32_0 = arith.constant 0 : i32
    %c0_i32_1 = arith.constant 0 : i32
    return %arg0, %c0_i32, %c0_i32_0 : i32, i32, i32
  }
  func.func @transform_5(%arg0: i32) -> (i32, i32) {
    %c0_i32 = arith.constant 0 : i32
    %c0_i32_0 = arith.constant 0 : i32
    %c0_i32_1 = arith.constant 0 : i32
    return %c0_i32, %c0_i32_0 : i32, i32
  }
  func.func @transform_6(%arg0: i32) -> (i32, i32) {
    %c0_i32 = arith.constant 0 : i32
    %c0_i32_0 = arith.constant 0 : i32
    %c0_i32_1 = arith.constant 0 : i32
    return %c0_i32, %c0_i32_0 : i32, i32
  }
  func.func @transform_7(%arg0: i32) -> (i32, i32) {
    %c0_i32 = arith.constant 0 : i32
    %c0_i32_0 = arith.constant 0 : i32
    return %arg0, %c0_i32 : i32, i32
  }
  func.func @transform_8(%arg0: i32) -> (i32, i32) {
    %c0_i32 = arith.constant 0 : i32
    %c0_i32_0 = arith.constant 0 : i32
    %c0_i32_1 = arith.constant 0 : i32
    return %c0_i32, %c0_i32_0 : i32, i32
  }
  func.func @transform_9(%arg0: i32) -> (i32, i32) {
    %c0_i32 = arith.constant 0 : i32
    %c0_i32_0 = arith.constant 0 : i32
    return %arg0, %c0_i32 : i32, i32
  }
  func.func @transform_10(%arg0: i32) -> (i32, i32) {
    %c0_i32 = arith.constant 0 : i32
    %c0_i32_0 = arith.constant 0 : i32
    return %arg0, %c0_i32 : i32, i32
  }
}

</mosaic_0001>

<llo_original>
// kernel: tpu_custom_call.1
$region0: #{tpu_custom_call.1}
  #allocation0 [shape = 'u32[]', space=smem, size = 0x4, offset = 0x4, fixed_abs, tag = 'smem constant byte address 0x4 - core index']
  #allocation1 [shape = 'u32[144,128]{1,0:T(1,128)}', space=vmem, size = 0x12000, scoped, tag = 'internal scratch']
  %s0 = inlined_call_operand.hbm [shape: f32[8,32], index: 0, kind: input, shape index: {}]
  %s1 = inlined_call_operand.vmem [shape: f32[8,8,32], index: 1, kind: input, shape index: {}]
  %s2 = inlined_call_operand.vmem [shape: f32[8,8,1], index: 2, kind: input, shape index: {}]
  %s3 = inlined_call_operand.hbm [shape: f32[8,32], index: 3, kind: input, shape index: {}]
  %s4 = inlined_call_operand.vmem [shape: f32[8,8,32], index: 4, kind: input, shape index: {}]
  %s5 = inlined_call_operand.vmem [shape: bf16[32,4], index: 5, kind: input, shape index: {}]
  %s6 = inlined_call_operand.vmem [shape: bf16[32,4], index: 6, kind: input, shape index: {}]
  %s7 = inlined_call_operand.vmem [shape: f32[8,4], index: 7, kind: input, shape index: {}]
  %s8 = inlined_call_operand.vmem [shape: f32[4,32], index: 8, kind: input, shape index: {}]
  %s9 = inlined_call_operand.hbm [shape: f32[8,8], index: 9, kind: output, shape index: {0}]
  %s10 = inlined_call_operand.hbm [shape: f32[8,64], index: 10, kind: output, shape index: {1}]
  %11 = xla_tuple %s9, %s10
  %s12 = sld [smem:[#allocation0]]
  $region62: #{tpu_custom_call.1} parent=0
    _
  %s14 = ssub.s32 1, %s12
  %s15 = scalar_select 0, %s14, %s12
  $region1: #{tpu_custom_call.1} parent=0
    #allocation2 [shape = 'u8[4096]{0}', space=vmem, size = 0x1000, scoped, tag = 'input window, operand 0, single buffered']
    #allocation3 [shape = 's32[1]{0}', space=sflag, size = 0x4, scoped, tag = 'scoped memory for tpu_custom_call.1']
    #allocation4 [shape = 's32[1]{0}', space=sflag, size = 0x4, scoped, tag = 'scoped memory for tpu_custom_call.1']
    #allocation5 [shape = 'u8[4096]{0}', space=vmem, size = 0x1000, scoped, tag = 'input window, operand 3, single buffered']
    #allocation6 [shape = 's32[1]{0}', space=sflag, size = 0x4, scoped, tag = 'scoped memory for tpu_custom_call.1']
    #allocation7 [shape = 'u8[4096]{0}', space=vmem, size = 0x1000, scoped, tag = 'output window, operand 0, single buffered']
    #allocation8 [shape = 'u8[4096]{0}', space=vmem, size = 0x1000, scoped, tag = 'output window, operand 1, single buffered']
    #allocation9 [shape = 's32[1]{0}', space=sflag, size = 0x4, scoped, tag = 'scoped memory for tpu_custom_call.1']
    %16 = vsyncpa [#allocation3], 0
    %17 = vsyncpa [#allocation6], 0
    %18 = vsyncpa [#allocation4], 0
    %19 = vsyncpa [#allocation9], 0
    // Predicated region
    $region2: #{tpu_custom_call.1} parent=1 // pred_check
      _
    $region3: #{tpu_custom_call.1} parent=1 // pred_check_branch
      %21 = sbr.rel (0) target = $region5
    $region4: #{tpu_custom_call.1} parent=1 // pred_region
      %s23 = ssub.s32 128, 128
      %24 = vsyncadd [#allocation3], %s23
      %s26 = sshll.u32 [#allocation2], 4
      %s27 = int_to_ptr.vmem [resolvable:$true] %s26
      %29 = dma.hbm_to_vmem [thread:$0]  %s0, 128, %s27, [#allocation3]
    $region5: #{tpu_custom_call.1} parent=1 // pred_fallthru
      _
    // Predicated region
    $region6: #{tpu_custom_call.1} parent=1 // pred_check
      _
    $region7: #{tpu_custom_call.1} parent=1 // pred_check_branch
      %31 = sbr.rel (0) target = $region9
    $region8: #{tpu_custom_call.1} parent=1 // pred_region
      _
    $region9: #{tpu_custom_call.1} parent=1 // pred_fallthru
      _
    // Predicated region
    $region10: #{tpu_custom_call.1} parent=1 // pred_check
      _
    $region11: #{tpu_custom_call.1} parent=1 // pred_check_branch
      %33 = sbr.rel (0) target = $region13
    $region12: #{tpu_custom_call.1} parent=1 // pred_region
      _
    $region13: #{tpu_custom_call.1} parent=1 // pred_fallthru
      _
    // Predicated region
    $region14: #{tpu_custom_call.1} parent=1 // pred_check
      _
    $region15: #{tpu_custom_call.1} parent=1 // pred_check_branch
      %35 = sbr.rel (0) target = $region17
    $region16: #{tpu_custom_call.1} parent=1 // pred_region
      %s37 = ssub.s32 128, 128
      %38 = vsyncadd [#allocation6], %s37
      %s40 = sshll.u32 [#allocation5], 4
      %s41 = int_to_ptr.vmem [resolvable:$true] %s40
      %43 = dma.hbm_to_vmem [thread:$0]  %s3, 128, %s41, [#allocation6]
    $region17: #{tpu_custom_call.1} parent=1 // pred_fallthru
      _
    // Predicated region
    $region18: #{tpu_custom_call.1} parent=1 // pred_check
      _
    $region19: #{tpu_custom_call.1} parent=1 // pred_check_branch
      %45 = sbr.rel (0) target = $region21
    $region20: #{tpu_custom_call.1} parent=1 // pred_region
      _
    $region21: #{tpu_custom_call.1} parent=1 // pred_fallthru
      _
    // Predicated region
    $region22: #{tpu_custom_call.1} parent=1 // pred_check
      _
    $region23: #{tpu_custom_call.1} parent=1 // pred_check_branch
      %47 = sbr.rel (0) target = $region25
    $region24: #{tpu_custom_call.1} parent=1 // pred_region
      _
    $region25: #{tpu_custom_call.1} parent=1 // pred_fallthru
      _
    // Predicated region
    $region26: #{tpu_custom_call.1} parent=1 // pred_check
      _
    $region27: #{tpu_custom_call.1} parent=1 // pred_check_branch
      %49 = sbr.rel (0) target = $region29
    $region28: #{tpu_custom_call.1} parent=1 // pred_region
      _
    $region29: #{tpu_custom_call.1} parent=1 // pred_fallthru
      _
    // Predicated region
    $region30: #{tpu_custom_call.1} parent=1 // pred_check
      _
    $region31: #{tpu_custom_call.1} parent=1 // pred_check_branch
      %51 = sbr.rel (0) target = $region33
    $region32: #{tpu_custom_call.1} parent=1 // pred_region
      _
    $region33: #{tpu_custom_call.1} parent=1 // pred_fallthru
      _
    // Predicated region
    $region34: #{tpu_custom_call.1} parent=1 // pred_check
      _
    $region35: #{tpu_custom_call.1} parent=1 // pred_check_branch
      %53 = sbr.rel (0) target = $region37
    $region36: #{tpu_custom_call.1} parent=1 // pred_region
      _
    $region37: #{tpu_custom_call.1} parent=1 // pred_fallthru
      _
    // Predicated region
    $region38: #{tpu_custom_call.1} parent=1 // pred_check
      _
    $region39: #{tpu_custom_call.1} parent=1 // pred_check_branch
      %55 = sbr.rel (0) target = $region41
    $region40: #{tpu_custom_call.1} parent=1 // pred_region
      %56 = dma.done [#allocation3], 128
    $region41: #{tpu_custom_call.1} parent=1 // pred_fallthru
      _
    // Predicated region
    $region42: #{tpu_custom_call.1} parent=1 // pred_check
      _
    $region43: #{tpu_custom_call.1} parent=1 // pred_check_branch
      %58 = sbr.rel (0) target = $region45
    $region44: #{tpu_custom_call.1} parent=1 // pred_region
      %59 = dma.done [#allocation6], 128
    $region45: #{tpu_custom_call.1} parent=1 // pred_fallthru
      _
    %v61 = vld [vmem:[%s1] sm:$0xff]
    %v62 = vld [vmem:[%s1 + $0x8] sm:$0xff]
    %v63 = vld [vmem:[%s1 + $0x10] sm:$0xff]
    %v64 = vld [vmem:[%s1 + $0x18] sm:$0xff]
    %v65 = vld [vmem:[%s1 + $0x20] sm:$0xff]
    %v66 = vld [vmem:[%s1 + $0x28] sm:$0xff]
    %v67 = vld [vmem:[%s1 + $0x30] sm:$0xff]
    %v68 = vld [vmem:[%s1 + $0x38] sm:$0xff]
    %v69 = vld [vmem:[#allocation2] sm:$0xff]
    %v70 = vmul.f32 %v69, %v69
    %vm71 = vcmask 261120
    %v72 = vsel %vm71, %v70, 0.0
    %73 = vadd.xlane.f32.xlu0 %v72
    %v74 = vpop.xlane.xlu0 %73
    %v75 = vrsqrt.pop %v74
    %v76 = vmul.f32 %v69, %v75
    %v77 = vmul.f32 %v61, %v61
    %v78 = vmul.f32 %v62, %v62
    %v79 = vmul.f32 %v63, %v63
    %v80 = vmul.f32 %v64, %v64
    %v81 = vmul.f32 %v65, %v65
    %v82 = vmul.f32 %v66, %v66
    %v83 = vmul.f32 %v67, %v67
    %v84 = vmul.f32 %v68, %v68
    %v85 = vsel %vm71, %v77, 0.0
    %86 = vadd.xlane.f32.xlu0 %v85
    %v87 = vpop.xlane.xlu0 %86
    %v88 = vsel %vm71, %v78, 0.0
    %89 = vadd.xlane.f32.xlu0 %v88
    %v90 = vpop.xlane.xlu0 %89
    %v91 = vsel %vm71, %v79, 0.0
    %92 = vadd.xlane.f32.xlu0 %v91
    %v93 = vpop.xlane.xlu0 %92
    %v94 = vsel %vm71, %v80, 0.0
    %95 = vadd.xlane.f32.xlu0 %v94
    %v96 = vpop.xlane.xlu0 %95
    %v97 = vsel %vm71, %v81, 0.0
    %98 = vadd.xlane.f32.xlu0 %v97
    %v99 = vpop.xlane.xlu0 %98
    %v100 = vsel %vm71, %v82, 0.0
    %101 = vadd.xlane.f32.xlu0 %v100
    %v102 = vpop.xlane.xlu0 %101
    %v103 = vsel %vm71, %v83, 0.0
    %104 = vadd.xlane.f32.xlu0 %v103
    %v105 = vpop.xlane.xlu0 %104
    %v106 = vsel %vm71, %v84, 0.0
    %107 = vadd.xlane.f32.xlu0 %v106
    %v108 = vpop.xlane.xlu0 %107
    %v109 = vrsqrt.pop %v87
    %v110 = vrsqrt.pop %v90
    %v111 = vrsqrt.pop %v93
    %v112 = vrsqrt.pop %v96
    %v113 = vrsqrt.pop %v99
    %v114 = vrsqrt.pop %v102
    %v115 = vrsqrt.pop %v105
    %v116 = vrsqrt.pop %v108
    %v117 = vmul.f32 %v61, %v109
    %v118 = vmul.f32 %v62, %v110
    %v119 = vmul.f32 %v63, %v111
    %v120 = vmul.f32 %v64, %v112
    %v121 = vmul.f32 %v65, %v113
    %v122 = vmul.f32 %v66, %v114
    %v123 = vmul.f32 %v67, %v115
    %v124 = vmul.f32 %v68, %v116
    %v125 = vld [vmem:[#allocation5] sm:$0xff]
    %v126 = vmul.f32 %v125, 0.03
    %v127 = vadd.f32 %v76, %v126
    %v128 = vld [vmem:[%s4] sm:$0xff]
    %v129 = vld [vmem:[%s4 + $0x8] sm:$0xff]
    %v130 = vld [vmem:[%s4 + $0x10] sm:$0xff]
    %v131 = vld [vmem:[%s4 + $0x18] sm:$0xff]
    %v132 = vld [vmem:[%s4 + $0x20] sm:$0xff]
    %v133 = vld [vmem:[%s4 + $0x28] sm:$0xff]
    %v134 = vld [vmem:[%s4 + $0x30] sm:$0xff]
    %v135 = vld [vmem:[%s4 + $0x38] sm:$0xff]
    %v136 = vmul.f32 %v128, 0.03
    %v137 = vmul.f32 %v129, 0.03
    %v138 = vmul.f32 %v130, 0.03
    %v139 = vmul.f32 %v131, 0.03
    %v140 = vmul.f32 %v132, 0.03
    %v141 = vmul.f32 %v133, 0.03
    %v142 = vmul.f32 %v134, 0.03
    %v143 = vmul.f32 %v135, 0.03
    %v144 = vadd.f32 %v117, %v136
    %v145 = vadd.f32 %v118, %v137
    %v146 = vadd.f32 %v119, %v138
    %v147 = vadd.f32 %v120, %v139
    %v148 = vadd.f32 %v121, %v140
    %v149 = vadd.f32 %v122, %v141
    %v150 = vadd.f32 %v123, %v142
    %v151 = vadd.f32 %v124, %v143
    %v152 = vld [vmem:[%s7] sm:$0xff]
    %vm153 = vcmp.ne.f32.partialorder %v152, 0.0
    %v154 = vsel %vm153, 1, 0
    %v155 = vcvt.s32.f32 %v154
    %vm156 = vcmask 31744
    %v157 = vsel %vm156, %v155, 0.0
    %158 = vadd.xlane.f32.xlu0 %v157
    %v159 = vpop.xlane.xlu0 %158
    %v160 = vld [vmem:[%s8] sm:$0xf]
    %v162 = vsel %vm156, %v155, 0
    %vm164 = vcmask 1043456
    %v166 = vsel %vm164, %v160, 0
    %168 = vmatprep.subr.mxu0 0.0
    %169 = vmatpush1.msra.mxu0 %v166
    %170 = vmatprep.subr.mxu0 0.0
    %171 = vmatpush1.msra.mxu0 0.0
    %172 = vmatprep.subr.mxu0 0.0
    %173 = vmatpush1.msra.mxu0 0.0
    %174 = vmatprep.subr.mxu0 0.0
    %175 = vmatpush1.msra.mxu0 0.0
    %176 = vmatprep.subr.mxu0 0.0
    %177 = vmatpush1.msra.mxu0 0.0
    %178 = vmatprep.subr.mxu0 0.0
    %179 = vmatpush1.msra.mxu0 0.0
    %180 = vmatprep.subr.mxu0 0.0
    %181 = vmatpush1.msra.mxu0 0.0
    %182 = vmatprep.subr.mxu0 0.0
    %183 = vmatpush1.msra.mxu0 0.0
    %184 = vmatprep.subr.mxu0 0.0
    %185 = vmatpush1.msra.mxu0 0.0
    %186 = vmatprep.subr.mxu0 0.0
    %187 = vmatpush1.msra.mxu0 0.0
    %188 = vmatprep.subr.mxu0 0.0
    %189 = vmatpush1.msra.mxu0 0.0
    %190 = vmatprep.subr.mxu0 0.0
    %191 = vmatpush1.msra.mxu0 0.0
    %192 = vmatprep.subr.mxu0 0.0
    %193 = vmatpush1.msra.mxu0 0.0
    %194 = vmatprep.subr.mxu0 0.0
    %195 = vmatpush1.msra.mxu0 0.0
    %196 = vmatprep.subr.mxu0 0.0
    %197 = vmatpush1.msra.mxu0 0.0
    %198 = vmatprep.subr.mxu0 0.0
    %199 = vmatpush1.msra.mxu0 0.0
    %200 = vmatprep.subr.mxu0 0.0
    %201 = vmatpush1.msra.mxu0 0.0
    %202 = vmatprep.subr.mxu0 0.0
    %203 = vmatpush1.msra.mxu0 0.0
    %204 = vmatprep.subr.mxu0 0.0
    %205 = vmatpush1.msra.mxu0 0.0
    %206 = vmatprep.subr.mxu0 0.0
    %207 = vmatpush1.msra.mxu0 0.0
    %208 = vmatprep.subr.mxu0 0.0
    %209 = vmatpush1.msra.mxu0 0.0
    %210 = vmatprep.subr.mxu0 0.0
    %211 = vmatpush1.msra.mxu0 0.0
    %212 = vmatprep.subr.mxu0 0.0
    %213 = vmatpush1.msra.mxu0 0.0
    %214 = vmatprep.subr.mxu0 0.0
    %215 = vmatpush1.msra.mxu0 0.0
    %216 = vmatprep.subr.mxu0 0.0
    %217 = vmatpush1.msra.mxu0 0.0
    %218 = vmatprep.subr.mxu0 0.0
    %219 = vmatpush1.msra.mxu0 0.0
    %220 = vmatprep.subr.mxu0 0.0
    %221 = vmatpush1.msra.mxu0 0.0
    %222 = vmatprep.subr.mxu0 0.0
    %223 = vmatpush1.msra.mxu0 0.0
    %224 = vmatprep.subr.mxu0 0.0
    %225 = vmatpush1.msra.mxu0 0.0
    %226 = vmatprep.subr.mxu0 0.0
    %227 = vmatpush1.msra.mxu0 0.0
    %228 = vmatprep.subr.mxu0 0.0
    %229 = vmatpush1.msra.mxu0 0.0
    %230 = vmatprep.subr.mxu0 0.0
    %231 = vmatpush1.msra.mxu0 0.0
    %232 = vmatprep.mubr.f32.mxu0 0.0
    %233 = vmatmul.mubr.f32.gmra.mrb[0].mxu0 %v162
    %v234 = vpop.f32.mrb[0].mxu0
    %v235 = vadd.f32 0.0, %v234
    %v236 = vpop.f32.mrb[0].mxu0
    %237 = vdwg.mxu0
    %v238 = vrcp.pop %v159
    %v239 = vmul.f32 %v235, %v238
    %v241 = vcombine.high %v239, %v239
    %v243 = vunpack.c.l.s4 1966171168
    %v244 = vunpack.c.0.s8 %v243
    %v245 = vlaneseq
    %v246 = vshrl.u32 %v245, 7
    %v247 = vsub.s32 %v244, %v246
    %v248 = vrot.slane %v239, %v247
    %v250 = vunpack.c.l.s4 1966171168
    %v251 = vunpack.c.0.s8 %v250
    %v252 = vlaneseq
    %v253 = vshrl.u32 %v252, 7
    %v254 = vsub.s32 %v251, %v253
    %v255 = vrot.slane %v241, %v254
    %v256 = vcombine.high %v248, %v248
    %v257 = vcombine.high %v255, %v255
    %v259 = vunpack.c.l.s4 1966171168
    %v260 = vunpack.c.0.s8 %v259
    %v261 = vlaneseq
    %v262 = vshrl.u32 %v261, 7
    %v263 = vsub.s32 %v260, %v262
    %v264 = vrot.slane %v248, %v263
    %v266 = vunpack.c.l.s4 1966171168
    %v267 = vunpack.c.0.s8 %v266
    %v268 = vlaneseq
    %v269 = vshrl.u32 %v268, 7
    %v270 = vsub.s32 %v267, %v269
    %v271 = vrot.slane %v255, %v270
    %v273 = vunpack.c.l.s4 1966171168
    %v274 = vunpack.c.0.s8 %v273
    %v275 = vlaneseq
    %v276 = vshrl.u32 %v275, 7
    %v277 = vsub.s32 %v274, %v276
    %v278 = vrot.slane %v256, %v277
    %v280 = vunpack.c.l.s4 1966171168
    %v281 = vunpack.c.0.s8 %v280
    %v282 = vlaneseq
    %v283 = vshrl.u32 %v282, 7
    %v284 = vsub.s32 %v281, %v283
    %v285 = vrot.slane %v257, %v284
    %v286 = vcombine.high %v264, %v264
    %v287 = vcombine.high %v271, %v271
    %v288 = vcombine.high %v278, %v278
    %v289 = vcombine.high %v285, %v285
    %v290 = vlaneseq
    %v291 = vshrl.u32 %v290, 7
    %v292 = vsub.s32 0, %v291
    %v293 = vrot.slane %v264, %v292
    %v294 = vlaneseq
    %v295 = vshrl.u32 %v294, 7
    %v296 = vsub.s32 0, %v295
    %v297 = vrot.slane %v278, %v296
    %v298 = vlaneseq
    %v299 = vshrl.u32 %v298, 7
    %v300 = vsub.s32 0, %v299
    %v301 = vrot.slane %v286, %v300
    %v302 = vlaneseq
    %v303 = vshrl.u32 %v302, 7
    %v304 = vsub.s32 0, %v303
    %v305 = vrot.slane %v288, %v304
    %v306 = vlaneseq
    %v307 = vshrl.u32 %v306, 7
    %v308 = vsub.s32 0, %v307
    %v309 = vrot.slane %v271, %v308
    %v310 = vlaneseq
    %v311 = vshrl.u32 %v310, 7
    %v312 = vsub.s32 0, %v311
    %v313 = vrot.slane %v285, %v312
    %v314 = vlaneseq
    %v315 = vshrl.u32 %v314, 7
    %v316 = vsub.s32 0, %v315
    %v317 = vrot.slane %v287, %v316
    %v318 = vlaneseq
    %v319 = vshrl.u32 %v318, 7
    %v320 = vsub.s32 0, %v319
    %v321 = vrot.slane %v289, %v320
    %v330 = vmul.f32 %v144, %v293
    %v331 = vmul.f32 %v145, %v297
    %v332 = vmul.f32 %v146, %v301
    %v333 = vmul.f32 %v147, %v305
    %v334 = vmul.f32 %v148, %v309
    %v335 = vmul.f32 %v149, %v313
    %v336 = vmul.f32 %v150, %v317
    %v337 = vmul.f32 %v151, %v321
    %v338 = vmul.f32 %v127, %v239
    %v339 = vmul.f32 %v338, 3.0
    %v340 = vpack.c.bf16 %v339, %v339
    %v341 = vld [vmem:[%s5] sm:$0xf]
    %v342 = vld [vmem:[%s5 + $0x4] sm:$0xf]
    %v343 = vld [vmem:[%s5 + $0x8] sm:$0xf]
    %v344 = vld [vmem:[%s5 + $0xc] sm:$0xf]
    %v349 = vunpack.c.l.b16 %v341
    %v350 = vunpack.c.l.b16 %v342
    %v351 = vunpack.c.l.b16 %v343
    %v352 = vunpack.c.l.b16 %v344
    %v353 = vpack.c.b16 %v350, %v349
    %v354 = vpack.c.b16 %v352, %v351
    %v358 = vsel %vm71, %v340, 0
    %360 = vmatprep.subr.bf16.mxu0 0
    %361 = vmatpush1.bf16.msra.mxu0 %v353
    %362 = vmatprep.subr.bf16.mxu0 0
    %363 = vmatpush1.bf16.msra.mxu0 %v354
    %364 = vmatprep.subr.bf16.mxu0 0
    %365 = vmatpush1.bf16.msra.mxu0 0
    %366 = vmatprep.subr.bf16.mxu0 0
    %367 = vmatpush1.bf16.msra.mxu0 0
    %368 = vmatprep.subr.bf16.mxu0 0
    %369 = vmatpush1.bf16.msra.mxu0 0
    %370 = vmatprep.subr.bf16.mxu0 0
    %371 = vmatpush1.bf16.msra.mxu0 0
    %372 = vmatprep.subr.bf16.mxu0 0
    %373 = vmatpush1.bf16.msra.mxu0 0
    %374 = vmatprep.subr.bf16.mxu0 0
    %375 = vmatpush1.bf16.msra.mxu0 0
    %376 = vmatprep.subr.bf16.mxu0 0
    %377 = vmatpush1.bf16.msra.mxu0 0
    %378 = vmatprep.subr.bf16.mxu0 0
    %379 = vmatpush1.bf16.msra.mxu0 0
    %380 = vmatprep.subr.bf16.mxu0 0
    %381 = vmatpush1.bf16.msra.mxu0 0
    %382 = vmatprep.subr.bf16.mxu0 0
    %383 = vmatpush1.bf16.msra.mxu0 0
    %384 = vmatprep.subr.bf16.mxu0 0
    %385 = vmatpush1.bf16.msra.mxu0 0
    %386 = vmatprep.subr.bf16.mxu0 0
    %387 = vmatpush1.bf16.msra.mxu0 0
    %388 = vmatprep.subr.bf16.mxu0 0
    %389 = vmatpush1.bf16.msra.mxu0 0
    %390 = vmatprep.subr.bf16.mxu0 0
    %391 = vmatpush1.bf16.msra.mxu0 0
    %392 = vmatprep.mubr.bf16.mxu0 0
    %393 = vmatmul.mubr.bf16.gmra.mrb[0].mxu0 %v358
    %v394 = vpop.f32.mrb[0].mxu0
    %v395 = vadd.f32 0.0, %v394
    %v396 = vpop.f32.mrb[0].mxu0
    %v397 = vpop.f32.mrb[0].mxu0
    %v398 = vpop.f32.mrb[0].mxu0
    %399 = vdwg.mxu0
    %v400 = vpack.c.bf16 %v331, %v330
    %v401 = vpack.c.bf16 %v333, %v332
    %v402 = vpack.c.bf16 %v335, %v334
    %v403 = vpack.c.bf16 %v337, %v336
    %v404 = vld [vmem:[%s6] sm:$0xf]
    %v405 = vld [vmem:[%s6 + $0x4] sm:$0xf]
    %v406 = vld [vmem:[%s6 + $0x8] sm:$0xf]
    %v407 = vld [vmem:[%s6 + $0xc] sm:$0xf]
    %v412 = vunpack.c.l.b16 %v404
    %v413 = vunpack.c.l.b16 %v405
    %v414 = vunpack.c.l.b16 %v406
    %v415 = vunpack.c.l.b16 %v407
    %v416 = vpack.c.b16 %v413, %v412
    %v417 = vpack.c.b16 %v415, %v414
    %v421 = vsel %vm71, %v400, 0
    %v424 = vsel %vm71, %v401, 0
    %v427 = vsel %vm71, %v402, 0
    %v430 = vsel %vm71, %v403, 0
    %432 = vmatprep.subr.bf16.mxu0 0
    %433 = vmatpush1.bf16.msra.mxu0 %v416
    %434 = vmatprep.subr.bf16.mxu0 0
    %435 = vmatpush1.bf16.msra.mxu0 %v417
    %436 = vmatprep.subr.bf16.mxu0 0
    %437 = vmatpush1.bf16.msra.mxu0 0
    %438 = vmatprep.subr.bf16.mxu0 0
    %439 = vmatpush1.bf16.msra.mxu0 0
    %440 = vmatprep.subr.bf16.mxu0 0
    %441 = vmatpush1.bf16.msra.mxu0 0
    %442 = vmatprep.subr.bf16.mxu0 0
    %443 = vmatpush1.bf16.msra.mxu0 0
    %444 = vmatprep.subr.bf16.mxu0 0
    %445 = vmatpush1.bf16.msra.mxu0 0
    %446 = vmatprep.subr.bf16.mxu0 0
    %447 = vmatpush1.bf16.msra.mxu0 0
    %448 = vmatprep.subr.bf16.mxu0 0
    %449 = vmatpush1.bf16.msra.mxu0 0
    %450 = vmatprep.subr.bf16.mxu0 0
    %451 = vmatpush1.bf16.msra.mxu0 0
    %452 = vmatprep.subr.bf16.mxu0 0
    %453 = vmatpush1.bf16.msra.mxu0 0
    %454 = vmatprep.subr.bf16.mxu0 0
    %455 = vmatpush1.bf16.msra.mxu0 0
    %456 = vmatprep.subr.bf16.mxu0 0
    %457 = vmatpush1.bf16.msra.mxu0 0
    %458 = vmatprep.subr.bf16.mxu0 0
    %459 = vmatpush1.bf16.msra.mxu0 0
    %460 = vmatprep.subr.bf16.mxu0 0
    %461 = vmatpush1.bf16.msra.mxu0 0
    %462 = vmatprep.subr.bf16.mxu0 0
    %463 = vmatpush1.bf16.msra.mxu0 0
    %464 = vmatprep.mubr.bf16.mxu0 0
    %465 = vmatmul.mubr.bf16.gmra.mrb[0].mxu0 %v421
    %v466 = vpop.f32.mrb[0].mxu0
    %v467 = vadd.f32 0.0, %v466
    %v468 = vpop.f32.mrb[0].mxu0
    %v469 = vpop.f32.mrb[0].mxu0
    %v470 = vadd.f32 0.0, %v469
    %v471 = vpop.f32.mrb[0].mxu0
    %472 = vmatprep.mubr.bf16.mxu0 0
    %473 = vmatmul.mubr.bf16.gmra.mrb[0].mxu0 %v424
    %v474 = vpop.f32.mrb[0].mxu0
    %v475 = vadd.f32 0.0, %v474
    %v476 = vpop.f32.mrb[0].mxu0
    %v477 = vpop.f32.mrb[0].mxu0
    %v478 = vadd.f32 0.0, %v477
    %v479 = vpop.f32.mrb[0].mxu0
    %480 = vmatprep.mubr.bf16.mxu0 0
    %481 = vmatmul.mubr.bf16.gmra.mrb[0].mxu0 %v427
    %v482 = vpop.f32.mrb[0].mxu0
    %v483 = vadd.f32 0.0, %v482
    %v484 = vpop.f32.mrb[0].mxu0
    %v485 = vpop.f32.mrb[0].mxu0
    %v486 = vadd.f32 0.0, %v485
    %v487 = vpop.f32.mrb[0].mxu0
    %488 = vmatprep.mubr.bf16.mxu0 0
    %489 = vmatmul.mubr.bf16.gmra.mrb[0].mxu0 %v430
    %v490 = vpop.f32.mrb[0].mxu0
    %v491 = vadd.f32 0.0, %v490
    %v492 = vpop.f32.mrb[0].mxu0
    %v493 = vpop.f32.mrb[0].mxu0
    %v494 = vadd.f32 0.0, %v493
    %v495 = vpop.f32.mrb[0].mxu0
    %496 = vdwg.mxu0
    %v497 = vmul.f32 %v467, 50.0
    %v498 = vmul.f32 %v470, 50.0
    %v499 = vmul.f32 %v475, 50.0
    %v500 = vmul.f32 %v478, 50.0
    %v501 = vmul.f32 %v483, 50.0
    %v502 = vmul.f32 %v486, 50.0
    %v503 = vmul.f32 %v491, 50.0
    %v504 = vmul.f32 %v494, 50.0
    %v505 = vld [vmem:[%s2] sm:$0xff]
    %v506 = vld [vmem:[%s2 + $0x8] sm:$0xff]
    %v507 = vld [vmem:[%s2 + $0x10] sm:$0xff]
    %v508 = vld [vmem:[%s2 + $0x18] sm:$0xff]
    %v509 = vld [vmem:[%s2 + $0x20] sm:$0xff]
    %v510 = vld [vmem:[%s2 + $0x28] sm:$0xff]
    %v511 = vld [vmem:[%s2 + $0x30] sm:$0xff]
    %v512 = vld [vmem:[%s2 + $0x38] sm:$0xff]
    %514 = vset.pattern.permute.xlu0 0
    %515 = vperm.xlu0 %514, %v505
    %v516 = vpop.permute.xlu0 %515
    %519 = vset.pattern.permute.xlu0 0
    %520 = vperm.xlu0 %519, %v506
    %v521 = vpop.permute.xlu0 %520
    %524 = vset.pattern.permute.xlu0 0
    %525 = vperm.xlu0 %524, %v507
    %v526 = vpop.permute.xlu0 %525
    %529 = vset.pattern.permute.xlu0 0
    %530 = vperm.xlu0 %529, %v508
    %v531 = vpop.permute.xlu0 %530
    %534 = vset.pattern.permute.xlu0 0
    %535 = vperm.xlu0 %534, %v509
    %v536 = vpop.permute.xlu0 %535
    %539 = vset.pattern.permute.xlu0 0
    %540 = vperm.xlu0 %539, %v510
    %v541 = vpop.permute.xlu0 %540
    %544 = vset.pattern.permute.xlu0 0
    %545 = vperm.xlu0 %544, %v511
    %v546 = vpop.permute.xlu0 %545
    %549 = vset.pattern.permute.xlu0 0
    %550 = vperm.xlu0 %549, %v512
    %v551 = vpop.permute.xlu0 %550
    %v553 = vadd.f32 %v497, %v516
    %v554 = vadd.f32 %v498, %v521
    %v555 = vadd.f32 %v499, %v526
    %v556 = vadd.f32 %v500, %v531
    %v557 = vadd.f32 %v501, %v536
    %v558 = vadd.f32 %v502, %v541
    %v559 = vadd.f32 %v503, %v546
    %v560 = vadd.f32 %v504, %v551
    %v561 = vsel %vm156, %v553, -inf
    %v562 = vrot.slane %v561, 4
    %v563 = vmax.f32 %v561, %v562
    %v564 = vrot.slane %v563, 2
    %v565 = vmax.f32 %v563, %v564
    %v566 = vrot.slane %v565, 1
    %v567 = vmax.f32 %v565, %v566
    %v568 = vsel %vm156, %v554, -inf
    %v569 = vrot.slane %v568, 4
    %v570 = vmax.f32 %v568, %v569
    %v571 = vrot.slane %v570, 2
    %v572 = vmax.f32 %v570, %v571
    %v573 = vrot.slane %v572, 1
    %v574 = vmax.f32 %v572, %v573
    %v575 = vsel %vm156, %v555, -inf
    %v576 = vrot.slane %v575, 4
    %v577 = vmax.f32 %v575, %v576
    %v578 = vrot.slane %v577, 2
    %v579 = vmax.f32 %v577, %v578
    %v580 = vrot.slane %v579, 1
    %v581 = vmax.f32 %v579, %v580
    %v582 = vsel %vm156, %v556, -inf
    %v583 = vrot.slane %v582, 4
    %v584 = vmax.f32 %v582, %v583
    %v585 = vrot.slane %v584, 2
    %v586 = vmax.f32 %v584, %v585
    %v587 = vrot.slane %v586, 1
    %v588 = vmax.f32 %v586, %v587
    %v589 = vsel %vm156, %v557, -inf
    %v590 = vrot.slane %v589, 4
    %v591 = vmax.f32 %v589, %v590
    %v592 = vrot.slane %v591, 2
    %v593 = vmax.f32 %v591, %v592
    %v594 = vrot.slane %v593, 1
    %v595 = vmax.f32 %v593, %v594
    %v596 = vsel %vm156, %v558, -inf
    %v597 = vrot.slane %v596, 4
    %v598 = vmax.f32 %v596, %v597
    %v599 = vrot.slane %v598, 2
    %v600 = vmax.f32 %v598, %v599
    %v601 = vrot.slane %v600, 1
    %v602 = vmax.f32 %v600, %v601
    %v603 = vsel %vm156, %v559, -inf
    %v604 = vrot.slane %v603, 4
    %v605 = vmax.f32 %v603, %v604
    %v606 = vrot.slane %v605, 2
    %v607 = vmax.f32 %v605, %v606
    %v608 = vrot.slane %v607, 1
    %v609 = vmax.f32 %v607, %v608
    %v610 = vsel %vm156, %v560, -inf
    %v611 = vrot.slane %v610, 4
    %v612 = vmax.f32 %v610, %v611
    %v613 = vrot.slane %v612, 2
    %v614 = vmax.f32 %v612, %v613
    %v615 = vrot.slane %v614, 1
    %v616 = vmax.f32 %v614, %v615
    %v617 = vsub.f32 %v553, %v567
    %v618 = vsub.f32 %v554, %v574
    %v619 = vsub.f32 %v555, %v581
    %v620 = vsub.f32 %v556, %v588
    %v621 = vsub.f32 %v557, %v595
    %v622 = vsub.f32 %v558, %v602
    %v623 = vsub.f32 %v559, %v609
    %v624 = vsub.f32 %v560, %v616
    %v625 = vmul.f32 %v617, 1.442695
    %v626 = vpow.pop %v625
    %v627 = vmul.f32 %v618, 1.442695
    %v628 = vpow.pop %v627
    %v629 = vmul.f32 %v619, 1.442695
    %v630 = vpow.pop %v629
    %v631 = vmul.f32 %v620, 1.442695
    %v632 = vpow.pop %v631
    %v633 = vmul.f32 %v621, 1.442695
    %v634 = vpow.pop %v633
    %v635 = vmul.f32 %v622, 1.442695
    %v636 = vpow.pop %v635
    %v637 = vmul.f32 %v623, 1.442695
    %v638 = vpow.pop %v637
    %v639 = vmul.f32 %v624, 1.442695
    %v640 = vpow.pop %v639
    %v641 = vsel %vm156, %v626, 0.0
    %v642 = vrot.slane %v641, 4
    %v643 = vadd.f32 %v641, %v642
    %v644 = vrot.slane %v643, 2
    %v645 = vadd.f32 %v643, %v644
    %v646 = vrot.slane %v645, 1
    %v647 = vadd.f32 %v645, %v646
    %v648 = vsel %vm156, %v628, 0.0
    %v649 = vrot.slane %v648, 4
    %v650 = vadd.f32 %v648, %v649
    %v651 = vrot.slane %v650, 2
    %v652 = vadd.f32 %v650, %v651
    %v653 = vrot.slane %v652, 1
    %v654 = vadd.f32 %v652, %v653
    %v655 = vsel %vm156, %v630, 0.0
    %v656 = vrot.slane %v655, 4
    %v657 = vadd.f32 %v655, %v656
    %v658 = vrot.slane %v657, 2
    %v659 = vadd.f32 %v657, %v658
    %v660 = vrot.slane %v659, 1
    %v661 = vadd.f32 %v659, %v660
    %v662 = vsel %vm156, %v632, 0.0
    %v663 = vrot.slane %v662, 4
    %v664 = vadd.f32 %v662, %v663
    %v665 = vrot.slane %v664, 2
    %v666 = vadd.f32 %v664, %v665
    %v667 = vrot.slane %v666, 1
    %v668 = vadd.f32 %v666, %v667
    %v669 = vsel %vm156, %v634, 0.0
    %v670 = vrot.slane %v669, 4
    %v671 = vadd.f32 %v669, %v670
    %v672 = vrot.slane %v671, 2
    %v673 = vadd.f32 %v671, %v672
    %v674 = vrot.slane %v673, 1
    %v675 = vadd.f32 %v673, %v674
    %v676 = vsel %vm156, %v636, 0.0
    %v677 = vrot.slane %v676, 4
    %v678 = vadd.f32 %v676, %v677
    %v679 = vrot.slane %v678, 2
    %v680 = vadd.f32 %v678, %v679
    %v681 = vrot.slane %v680, 1
    %v682 = vadd.f32 %v680, %v681
    %v683 = vsel %vm156, %v638, 0.0
    %v684 = vrot.slane %v683, 4
    %v685 = vadd.f32 %v683, %v684
    %v686 = vrot.slane %v685, 2
    %v687 = vadd.f32 %v685, %v686
    %v688 = vrot.slane %v687, 1
    %v689 = vadd.f32 %v687, %v688
    %v690 = vsel %vm156, %v640, 0.0
    %v691 = vrot.slane %v690, 4
    %v692 = vadd.f32 %v690, %v691
    %v693 = vrot.slane %v692, 2
    %v694 = vadd.f32 %v692, %v693
    %v695 = vrot.slane %v694, 1
    %v696 = vadd.f32 %v694, %v695
    %v697 = vrcp.pop %v647
    %v698 = vrcp.pop %v654
    %v699 = vrcp.pop %v661
    %v700 = vrcp.pop %v668
    %v701 = vrcp.pop %v675
    %v702 = vrcp.pop %v682
    %v703 = vrcp.pop %v689
    %v704 = vrcp.pop %v696
    %v705 = vmul.f32 %v626, %v697
    %v706 = vmul.f32 %v628, %v698
    %v707 = vmul.f32 %v630, %v699
    %v708 = vmul.f32 %v632, %v700
    %v709 = vmul.f32 %v634, %v701
    %v710 = vmul.f32 %v636, %v702
    %v711 = vmul.f32 %v638, %v703
    %v712 = vmul.f32 %v640, %v704
    %v713 = vmul.f32 %v705, %v467
    %v714 = vmul.f32 %v706, %v470
    %v715 = vmul.f32 %v707, %v475
    %v716 = vmul.f32 %v708, %v478
    %v717 = vmul.f32 %v709, %v483
    %v718 = vmul.f32 %v710, %v486
    %v719 = vmul.f32 %v711, %v491
    %v720 = vmul.f32 %v712, %v494
    %v721 = vsel %vm156, %v713, 0.0
    %v722 = vrot.slane %v721, 4
    %v723 = vadd.f32 %v721, %v722
    %v724 = vrot.slane %v723, 2
    %v725 = vadd.f32 %v723, %v724
    %v726 = vrot.slane %v725, 1
    %v727 = vadd.f32 %v725, %v726
    %v728 = vsel %vm156, %v714, 0.0
    %v729 = vrot.slane %v728, 4
    %v730 = vadd.f32 %v728, %v729
    %v731 = vrot.slane %v730, 2
    %v732 = vadd.f32 %v730, %v731
    %v733 = vrot.slane %v732, 1
    %v734 = vadd.f32 %v732, %v733
    %v735 = vsel %vm156, %v715, 0.0
    %v736 = vrot.slane %v735, 4
    %v737 = vadd.f32 %v735, %v736
    %v738 = vrot.slane %v737, 2
    %v739 = vadd.f32 %v737, %v738
    %v740 = vrot.slane %v739, 1
    %v741 = vadd.f32 %v739, %v740
    %v742 = vsel %vm156, %v716, 0.0
    %v743 = vrot.slane %v742, 4
    %v744 = vadd.f32 %v742, %v743
    %v745 = vrot.slane %v744, 2
    %v746 = vadd.f32 %v744, %v745
    %v747 = vrot.slane %v746, 1
    %v748 = vadd.f32 %v746, %v747
    %v749 = vsel %vm156, %v717, 0.0
    %v750 = vrot.slane %v749, 4
    %v751 = vadd.f32 %v749, %v750
    %v752 = vrot.slane %v751, 2
    %v753 = vadd.f32 %v751, %v752
    %v754 = vrot.slane %v753, 1
    %v755 = vadd.f32 %v753, %v754
    %v756 = vsel %vm156, %v718, 0.0
    %v757 = vrot.slane %v756, 4
    %v758 = vadd.f32 %v756, %v757
    %v759 = vrot.slane %v758, 2
    %v760 = vadd.f32 %v758, %v759
    %v761 = vrot.slane %v760, 1
    %v762 = vadd.f32 %v760, %v761
    %v763 = vsel %vm156, %v719, 0.0
    %v764 = vrot.slane %v763, 4
    %v765 = vadd.f32 %v763, %v764
    %v766 = vrot.slane %v765, 2
    %v767 = vadd.f32 %v765, %v766
    %v768 = vrot.slane %v767, 1
    %v769 = vadd.f32 %v767, %v768
    %v770 = vsel %vm156, %v720, 0.0
    %v771 = vrot.slane %v770, 4
    %v772 = vadd.f32 %v770, %v771
    %v773 = vrot.slane %v772, 2
    %v774 = vadd.f32 %v772, %v773
    %v775 = vrot.slane %v774, 1
    %v776 = vadd.f32 %v774, %v775
    %v777 = vsel %vm71, %v330, 0.0
    %v778 = vrot.slane %v777, 4
    %v779 = vadd.f32 %v777, %v778
    %v780 = vrot.slane %v779, 2
    %v781 = vadd.f32 %v779, %v780
    %v782 = vrot.slane %v781, 1
    %v783 = vadd.f32 %v781, %v782
    %v784 = vsel %vm71, %v331, 0.0
    %v785 = vrot.slane %v784, 4
    %v786 = vadd.f32 %v784, %v785
    %v787 = vrot.slane %v786, 2
    %v788 = vadd.f32 %v786, %v787
    %v789 = vrot.slane %v788, 1
    %v790 = vadd.f32 %v788, %v789
    %v791 = vsel %vm71, %v332, 0.0
    %v792 = vrot.slane %v791, 4
    %v793 = vadd.f32 %v791, %v792
    %v794 = vrot.slane %v793, 2
    %v795 = vadd.f32 %v793, %v794
    %v796 = vrot.slane %v795, 1
    %v797 = vadd.f32 %v795, %v796
    %v798 = vsel %vm71, %v333, 0.0
    %v799 = vrot.slane %v798, 4
    %v800 = vadd.f32 %v798, %v799
    %v801 = vrot.slane %v800, 2
    %v802 = vadd.f32 %v800, %v801
    %v803 = vrot.slane %v802, 1
    %v804 = vadd.f32 %v802, %v803
    %v805 = vsel %vm71, %v334, 0.0
    %v806 = vrot.slane %v805, 4
    %v807 = vadd.f32 %v805, %v806
    %v808 = vrot.slane %v807, 2
    %v809 = vadd.f32 %v807, %v808
    %v810 = vrot.slane %v809, 1
    %v811 = vadd.f32 %v809, %v810
    %v812 = vsel %vm71, %v335, 0.0
    %v813 = vrot.slane %v812, 4
    %v814 = vadd.f32 %v812, %v813
    %v815 = vrot.slane %v814, 2
    %v816 = vadd.f32 %v814, %v815
    %v817 = vrot.slane %v816, 1
    %v818 = vadd.f32 %v816, %v817
    %v819 = vsel %vm71, %v336, 0.0
    %v820 = vrot.slane %v819, 4
    %v821 = vadd.f32 %v819, %v820
    %v822 = vrot.slane %v821, 2
    %v823 = vadd.f32 %v821, %v822
    %v824 = vrot.slane %v823, 1
    %v825 = vadd.f32 %v823, %v824
    %v826 = vsel %vm71, %v337, 0.0
    %v827 = vrot.slane %v826, 4
    %v828 = vadd.f32 %v826, %v827
    %v829 = vrot.slane %v828, 2
    %v830 = vadd.f32 %v828, %v829
    %v831 = vrot.slane %v830, 1
    %v832 = vadd.f32 %v830, %v831
    %v833 = vmul.f32 %v783, 0.125
    %v834 = vmul.f32 %v790, 0.125
    %v835 = vmul.f32 %v797, 0.125
    %v836 = vmul.f32 %v804, 0.125
    %v837 = vmul.f32 %v811, 0.125
    %v838 = vmul.f32 %v818, 0.125
    %v839 = vmul.f32 %v825, 0.125
    %v840 = vmul.f32 %v832, 0.125
    %841 = vst.msk [vmem:[#allocation7] sm:$0xff] %vm156, %v395
    %vm850 = vcmask 1041409
    %v851 = vsel %vm850, %v734, %v727
    %vm852 = vcmask 1042434
    %v853 = vsel %vm852, %v741, %v851
    %vm854 = vcmask 1043459
    %v855 = vsel %vm854, %v748, %v853
    %vm856 = vcmask 1044484
    %v857 = vsel %vm856, %v755, %v855
    %vm858 = vcmask 1045509
    %v859 = vsel %vm858, %v762, %v857
    %vm860 = vcmask 1046534
    %v861 = vsel %vm860, %v769, %v859
    %vm862 = vcmask 1047559
    %v863 = vsel %vm862, %v776, %v861
    %864 = vrot.lane.b32.xlu0 %v863, 4
    %v865 = vpop.permute.xlu0 %864
    %vm867 = vcmask 64544
    %868 = vst.msk [vmem:[#allocation7] sm:$0xff] %vm867, %v865
    %869 = vst.msk [vmem:[#allocation8] sm:$0xff] %vm71, %v338
    %v878 = vsel %vm850, %v834, %v833
    %v879 = vsel %vm852, %v835, %v878
    %v880 = vsel %vm854, %v836, %v879
    %v881 = vsel %vm856, %v837, %v880
    %v882 = vsel %vm858, %v838, %v881
    %v883 = vsel %vm860, %v839, %v882
    %v884 = vsel %vm862, %v840, %v883
    %885 = vrot.lane.b32.xlu0 %v884, 32
    %v886 = vpop.permute.xlu0 %885
    %vm888 = vcmask 523520
    %889 = vst.msk [vmem:[#allocation8] sm:$0xff] %vm888, %v886
    // Predicated region
    $region46: #{tpu_custom_call.1} parent=1 // pred_check
      _
    $region47: #{tpu_custom_call.1} parent=1 // pred_check_branch
      %891 = sbr.rel (0) target = $region49
    $region48: #{tpu_custom_call.1} parent=1 // pred_region
      %s893 = ssub.s32 128, 128
      %894 = vsyncadd [#allocation4], %s893
      %s896 = sshll.u32 [#allocation7], 4
      %s897 = int_to_ptr.vmem [resolvable:$true] %s896
      %899 = dma.vmem_to_hbm [thread:$0]  %s897, 128, %s9, [#allocation4]
    $region49: #{tpu_custom_call.1} parent=1 // pred_fallthru
      _
    // Predicated region
    $region50: #{tpu_custom_call.1} parent=1 // pred_check
      _
    $region51: #{tpu_custom_call.1} parent=1 // pred_check_branch
      %901 = sbr.rel (0) target = $region53
    $region52: #{tpu_custom_call.1} parent=1 // pred_region
      %s903 = ssub.s32 128, 128
      %904 = vsyncadd [#allocation9], %s903
      %s906 = sshll.u32 [#allocation8], 4
      %s907 = int_to_ptr.vmem [resolvable:$true] %s906
      %909 = dma.vmem_to_hbm [thread:$0]  %s907, 128, %s10, [#allocation9]
    $region53: #{tpu_custom_call.1} parent=1 // pred_fallthru
      _
    // Predicated region
    $region54: #{tpu_custom_call.1} parent=1 // pred_check
      _
    $region55: #{tpu_custom_call.1} parent=1 // pred_check_branch
      %911 = sbr.rel (0) target = $region57
    $region56: #{tpu_custom_call.1} parent=1 // pred_region
      %912 = dma.done [#allocation4], 128
    $region57: #{tpu_custom_call.1} parent=1 // pred_fallthru
      _
    // Predicated region
    $region58: #{tpu_custom_call.1} parent=1 // pred_check
      _
    $region59: #{tpu_custom_call.1} parent=1 // pred_check_branch
      %914 = sbr.rel (0) target = $region61
    $region60: #{tpu_custom_call.1} parent=1 // pred_region
      %915 = dma.done [#allocation9], 128
    $region61: #{tpu_custom_call.1} parent=1 // pred_fallthru
      _
    %916 = vsyncpa [#allocation3], 1
    %917 = vsyncpa [#allocation6], 1
    %918 = vsyncpa [#allocation4], 1
    %919 = vsyncpa [#allocation9], 1

</llo_original>
